<compile_context>
chip_gen: v6e
topology: v6e:2x2x1
jax: 0.10.0
libtpu: 0.0.40
codegen_flags: <defaults>
</compile_context>

<pallas_src>
import functools

import jax
import jax.numpy as jnp
from jax.experimental import pallas as pl
from jax.experimental.pallas import tpu as pltpu


def _round_up(x, m):
    return (x + m - 1) // m * m


def _cdiv(a, b):
    return (a + b - 1) // b


def _mlp_kernel(n_layers, x_ref, *refs):
    """Fused MLP on one (tile_n, d_in) row tile; weights/biases are VMEM-resident.

    refs = (w_0, b_0, w_1, b_1, ..., w_{L-1}, b_{L-1}, o_ref)
    """
    o_ref = refs[-1]
    param_refs = refs[:-1]

    h = x_ref[...].astype(jnp.bfloat16)                  # cast in-kernel (VPU, free vs HBM)
    for l in range(n_layers):
        w = param_refs[2 * l][...]                       # (d_l, d_{l+1}) bf16
        b = param_refs[2 * l + 1][...]                   # (1, d_{l+1}) f32
        acc = jnp.dot(h, w, preferred_element_type=jnp.float32) + b
        if l != n_layers - 1:
            # Dropout (eval mode) is identity, then ReLU; next MXU pass takes bf16.
            h = jnp.maximum(acc, 0.0).astype(jnp.bfloat16)
        else:
            o_ref[...] = acc.astype(o_ref.dtype)


def prepare_mlp_params(weights, biases):
    """One-time cast: weights -> bf16 MXU operands, biases -> (1, d) f32.

    Hoisted out of mlp_forward so the per-call path never re-reads/re-casts the weights.
    """
    params = []
    for w, b in zip(weights, biases):
        params.append(jnp.asarray(w, jnp.bfloat16))
        params.append(jnp.asarray(b, jnp.float32).reshape(1, -1))
    return tuple(params)


def _vmem_ceiling_bytes():
    try:
        cap = int(pltpu.get_tpu_info().vmem_capacity_bytes)
    except Exception:
        cap = 64 << 20                                   # conservative (v7x per-core VMEM)
    return int(cap * 0.85)                               # ~54 MiB on v7x, ~108 MiB on v5e/v6e


def _choose_row_tiling(n_rows, d_in, d_out, max_d, param_bytes, vmem_ceiling, target_tile_n):
    # f32 bytes/row for double-buffered x & out tiles + f32 intermediate headroom.
    per_row = 2 * 4 * (d_in + d_out) + 2 * 4 * max_d
    budget_rows = max((vmem_ceiling - param_bytes - (4 << 20)) // per_row, 16)
    target = max(min(target_tile_n, budget_rows), 16)

    n_steps = max(_cdiv(n_rows, target), 1)
    if n_rows >= 32:
        # >= 2 grid steps (even count) so the "parallel" row axis keeps both v7x
        # TensorCores busy; on v5e/v6e the extra step costs only ~0.35us.
        n_steps = max(n_steps, 2)
        if n_steps % 2:
            n_steps += 1
    return _round_up(_cdiv(n_rows, n_steps), 16)         # 16: bf16 sublane packing


def mlp_forward(x, params, *, target_tile_n=1024):
    """x: (1, N, d_in) f32. params: output of prepare_mlp_params()."""
    x2d = jnp.squeeze(x, axis=0)                         # matches `x = x.squeeze(0)`
    n_rows, d_in = x2d.shape
    n_layers = len(params) // 2
    layer_dims = [d_in] + [params[2 * l].shape[1] for l in range(n_layers)]
    d_out = layer_dims[-1]

    param_bytes = sum(int(p.size) * p.dtype.itemsize for p in params)
    vmem_ceiling = _vmem_ceiling_bytes()
    tile_n = _choose_row_tiling(n_rows, d_in, d_out, max(layer_dims), param_bytes,
                                vmem_ceiling, target_tile_n)
    grid = (_cdiv(n_rows, tile_n),)                      # non-divisible grid: edge rows masked

    kernel = functools.partial(_mlp_kernel, n_layers)
    out_shape = jax.ShapeDtypeStruct((n_rows, d_out), jnp.float32)

    def build_and_run(single_buffer_params):
        # Weights/biases never change across grid steps (constant index_map) so they are
        # VMEM-resident; Buffered(1) avoids paying a useless second buffer for them.
        extra = {"pipeline_mode": pl.Buffered(1)} if single_buffer_params else {}
        in_specs = [pl.BlockSpec((tile_n, d_in), lambda i: (i, 0))]
        for l in range(n_layers):
            in_specs.append(pl.BlockSpec((layer_dims[l], layer_dims[l + 1]),
                                         lambda i: (0, 0), **extra))
            in_specs.append(pl.BlockSpec((1, layer_dims[l + 1]),
                                         lambda i: (0, 0), **extra))
        out_spec = pl.BlockSpec((tile_n, d_out), lambda i: (i, 0))

        param_buffers = 1 if single_buffer_params else 2
        vmem_needed = (2 * tile_n * d_in * 4             # x tile (f32), double-buffered
                       + 2 * tile_n * d_out * 4          # out tile (f32), double-buffered
                       + param_buffers * param_bytes     # resident weights/biases
                       + 2 * tile_n * max(layer_dims) * 4)  # f32 intermediates headroom
        vmem_limit = int(min(max(2 * vmem_needed, 16 << 20), vmem_ceiling))
        vmem_limit = int(max(vmem_limit, vmem_needed + (1 << 20)))  # never below the need

        return pl.pallas_call(
            kernel,
            out_shape=out_shape,
            grid=grid,
            in_specs=in_specs,
            out_specs=out_spec,
            compiler_params=pltpu.CompilerParams(
                dimension_semantics=("parallel",),
                vmem_limit_bytes=vmem_limit,
            ),
        )(x2d, *params)

    try:
        return build_and_run(True)
    except Exception:
        # Fallback if this JAX build rejects Buffered(1): default double-buffered params.
        return build_and_run(False)


def init_mlp_params(key, dims):
    """Deterministic init mimicking torch.nn.Linear: U(-1/sqrt(fan_in), 1/sqrt(fan_in))."""
    weights, biases = [], []
    for i in range(len(dims) - 1):
        fan_in, fan_out = dims[i], dims[i + 1]
        key, kw, kb = jax.random.split(key, 3)
        bound = 1.0 / (fan_in ** 0.5)
        weights.append(jax.random.uniform(kw, (fan_in, fan_out), jnp.float32, -bound, bound))
        biases.append(jax.random.uniform(kb, (1, fan_out), jnp.float32, -bound, bound))
    return weights, biases


def _ref_forward(x, weights, biases):
    """Pure-JAX reference with the same bf16-operand / f32-accumulate numerics."""
    h = jnp.squeeze(x, axis=0)
    n = len(weights)
    for l, (w, b) in enumerate(zip(weights, biases)):
        h = jnp.dot(h.astype(jnp.bfloat16).astype(jnp.float32),
                    w.astype(jnp.bfloat16).astype(jnp.float32),
                    preferred_element_type=jnp.float32) + b
        if l != n - 1:
            h = jnp.maximum(h, 0.0)
    return h


if __name__ == "__main__":
    dims = [32, 64, 16]   # MLP([32,64,16]): Linear(32,64) -> Dropout -> ReLU -> Linear(64,16)

    key = jax.random.PRNGKey(0)
    key, kx1, kx2 = jax.random.split(key, 3)
    weights, biases = init_mlp_params(key, dims)
    params = prepare_mlp_params(weights, biases)          # one-time cast, hoisted out of forward

    # Small shape matching the PyTorch forward's (1, N, d_in) -> squeeze(0) convention.
    x_small = jax.random.normal(kx1, (1, 8, dims[0]), jnp.float32)
    out_small = jax.block_until_ready(mlp_forward(x_small, params))
    ref_small = _ref_forward(x_small, weights, biases)
    assert out_small.shape == (8, dims[-1]), out_small.shape
    assert jnp.allclose(out_small, ref_small, atol=1e-2, rtol=1e-2)

    # Larger row count to exercise the multi-step (2 TensorCore-friendly) row grid.
    x_big = jax.random.normal(kx2, (1, 300, dims[0]), jnp.float32)
    out_big = jax.block_until_ready(mlp_forward(x_big, params))
    ref_big = _ref_forward(x_big, weights, biases)
    assert out_big.shape == (300, dims[-1]), out_big.shape
    assert jnp.allclose(out_big, ref_big, atol=1e-2, rtol=1e-2)

    print("KERNEL_OK")
</pallas_src>

<mosaic_0001>
module attributes {stable_mosaic.version = 11 : i64} {
  func.func @_mlp_kernel(%arg0: i32, %arg1: memref<16x32xf32, #tpu.memory_space<vmem>>, %arg2: memref<32x64xbf16, #tpu.memory_space<vmem>>, %arg3: memref<1x64xf32, #tpu.memory_space<vmem>>, %arg4: memref<64x16xbf16, #tpu.memory_space<vmem>>, %arg5: memref<1x16xf32, #tpu.memory_space<vmem>>, %arg6: memref<16x16xf32, #tpu.memory_space<vmem>>) attributes {dimension_semantics = [#tpu.dimension_semantics<parallel>], iteration_bounds = array<i64: 1>, scalar_prefetch = 0 : i64, scratch_operands = 0 : i64, tpu.core_type = #tpu.core_type<tc>, window_params = [{transform_indices = @transform_0, window_bounds = array<i64: 16, 32>}, {pipeline_mode = #tpu.pipeline_mode<synchronous>, transform_indices = @transform_1, window_bounds = array<i64: 32, 64>}, {pipeline_mode = #tpu.pipeline_mode<synchronous>, transform_indices = @transform_2, window_bounds = array<i64: 1, 64>}, {pipeline_mode = #tpu.pipeline_mode<synchronous>, transform_indices = @transform_3, window_bounds = array<i64: 64, 16>}, {pipeline_mode = #tpu.pipeline_mode<synchronous>, transform_indices = @transform_4, window_bounds = array<i64: 1, 16>}, {transform_indices = @transform_5, window_bounds = array<i64: 16, 16>}]} {
    %c0 = arith.constant 0 : index
    %c0_0 = arith.constant 0 : index
    %0 = vector.load %arg1[%c0, %c0_0] : memref<16x32xf32, #tpu.memory_space<vmem>>, vector<16x32xf32>
    %1 = arith.truncf %0 : vector<16x32xf32> to vector<16x32xbf16>
    %c0_1 = arith.constant 0 : index
    %c0_2 = arith.constant 0 : index
    %2 = vector.load %arg2[%c0_1, %c0_2] : memref<32x64xbf16, #tpu.memory_space<vmem>>, vector<32x64xbf16>
    %c0_3 = arith.constant 0 : index
    %c0_4 = arith.constant 0 : index
    %3 = vector.load %arg3[%c0_3, %c0_4] : memref<1x64xf32, #tpu.memory_space<vmem>>, vector<1x64xf32>
    %cst = arith.constant dense<0.000000e+00> : vector<16x64xf32>
    %4 = tpu.matmul %1, %2, %cst {dimension_numbers = #tpu.dot_dimension_numbers<[1], [0], [0], [1], [0, 0, 1, 1], [], []>} : vector<16x32xbf16>, vector<32x64xbf16>, vector<16x64xf32> -> vector<16x64xf32>
    %5 = vector.broadcast %3 : vector<1x64xf32> to vector<16x64xf32>
    %6 = arith.addf %4, %5 : vector<16x64xf32>
    %cst_5 = arith.constant 0.000000e+00 : f32
    %7 = vector.broadcast %cst_5 : f32 to vector<16x64xf32>
    %8 = arith.maximumf %6, %7 : vector<16x64xf32>
    %9 = arith.truncf %8 : vector<16x64xf32> to vector<16x64xbf16>
    %c0_6 = arith.constant 0 : index
    %c0_7 = arith.constant 0 : index
    %10 = vector.load %arg4[%c0_6, %c0_7] : memref<64x16xbf16, #tpu.memory_space<vmem>>, vector<64x16xbf16>
    %c0_8 = arith.constant 0 : index
    %c0_9 = arith.constant 0 : index
    %11 = vector.load %arg5[%c0_8, %c0_9] : memref<1x16xf32, #tpu.memory_space<vmem>>, vector<1x16xf32>
    %cst_10 = arith.constant dense<0.000000e+00> : vector<16x16xf32>
    %12 = tpu.matmul %9, %10, %cst_10 {dimension_numbers = #tpu.dot_dimension_numbers<[1], [0], [0], [1], [0, 0, 1, 1], [], []>} : vector<16x64xbf16>, vector<64x16xbf16>, vector<16x16xf32> -> vector<16x16xf32>
    %13 = vector.broadcast %11 : vector<1x16xf32> to vector<16x16xf32>
    %14 = arith.addf %12, %13 : vector<16x16xf32>
    %c0_11 = arith.constant 0 : index
    %c0_12 = arith.constant 0 : index
    %15 = vector.load %arg6[%c0_11, %c0_12] : memref<16x16xf32, #tpu.memory_space<vmem>>, vector<16x16xf32>
    tpu.vector_store %arg6[%c0_11, %c0_12], %14 {strides = array<i32>} : memref<16x16xf32, #tpu.memory_space<vmem>>, vector<16x16xf32>,
    return
  }
  func.func @transform_0(%arg0: i32) -> (i32, i32) {
    %c0_i32 = arith.constant 0 : i32
    %c0_i32_0 = arith.constant 0 : i32
    return %arg0, %c0_i32 : i32, i32
  }
  func.func @transform_1(%arg0: i32) -> (i32, i32) {
    %c0_i32 = arith.constant 0 : i32
    %c0_i32_0 = arith.constant 0 : i32
    %c0_i32_1 = arith.constant 0 : i32
    return %c0_i32, %c0_i32_0 : i32, i32
  }
  func.func @transform_2(%arg0: i32) -> (i32, i32) {
    %c0_i32 = arith.constant 0 : i32
    %c0_i32_0 = arith.constant 0 : i32
    %c0_i32_1 = arith.constant 0 : i32
    return %c0_i32, %c0_i32_0 : i32, i32
  }
  func.func @transform_3(%arg0: i32) -> (i32, i32) {
    %c0_i32 = arith.constant 0 : i32
    %c0_i32_0 = arith.constant 0 : i32
    %c0_i32_1 = arith.constant 0 : i32
    return %c0_i32, %c0_i32_0 : i32, i32
  }
  func.func @transform_4(%arg0: i32) -> (i32, i32) {
    %c0_i32 = arith.constant 0 : i32
    %c0_i32_0 = arith.constant 0 : i32
    %c0_i32_1 = arith.constant 0 : i32
    return %c0_i32, %c0_i32_0 : i32, i32
  }
  func.func @transform_5(%arg0: i32) -> (i32, i32) {
    %c0_i32 = arith.constant 0 : i32
    %c0_i32_0 = arith.constant 0 : i32
    return %arg0, %c0_i32 : i32, i32
  }
}

module attributes {stable_mosaic.version = 11 : i64} {
  func.func @_mlp_kernel(%arg0: i32, %arg1: memref<16x32xf32, #tpu.memory_space<vmem>>, %arg2: memref<32x64xbf16, #tpu.memory_space<vmem>>, %arg3: memref<1x64xf32, #tpu.memory_space<vmem>>, %arg4: memref<64x16xbf16, #tpu.memory_space<vmem>>, %arg5: memref<1x16xf32, #tpu.memory_space<vmem>>, %arg6: memref<16x16xf32, #tpu.memory_space<vmem>>) attributes {dimension_semantics = [#tpu.dimension_semantics<parallel>], iteration_bounds = array<i64: 1>, scalar_prefetch = 0 : i64, scratch_operands = 0 : i64, tpu.core_type = #tpu.core_type<tc>, window_params = [{transform_indices = @transform_0, window_bounds = array<i64: 16, 32>}, {pipeline_mode = #tpu.pipeline_mode<synchronous>, transform_indices = @transform_1, window_bounds = array<i64: 32, 64>}, {pipeline_mode = #tpu.pipeline_mode<synchronous>, transform_indices = @transform_2, window_bounds = array<i64: 1, 64>}, {pipeline_mode = #tpu.pipeline_mode<synchronous>, transform_indices = @transform_3, window_bounds = array<i64: 64, 16>}, {pipeline_mode = #tpu.pipeline_mode<synchronous>, transform_indices = @transform_4, window_bounds = array<i64: 1, 16>}, {transform_indices = @transform_5, window_bounds = array<i64: 16, 16>}]} {
    %c0 = arith.constant 0 : index
    %c0_0 = arith.constant 0 : index
    %0 = vector.load %arg1[%c0, %c0_0] : memref<16x32xf32, #tpu.memory_space<vmem>>, vector<16x32xf32>
    %1 = arith.truncf %0 : vector<16x32xf32> to vector<16x32xbf16>
    %c0_1 = arith.constant 0 : index
    %c0_2 = arith.constant 0 : index
    %2 = vector.load %arg2[%c0_1, %c0_2] : memref<32x64xbf16, #tpu.memory_space<vmem>>, vector<32x64xbf16>
    %c0_3 = arith.constant 0 : index
    %c0_4 = arith.constant 0 : index
    %3 = vector.load %arg3[%c0_3, %c0_4] : memref<1x64xf32, #tpu.memory_space<vmem>>, vector<1x64xf32>
    %cst = arith.constant dense<0.000000e+00> : vector<16x64xf32>
    %4 = tpu.matmul %1, %2, %cst {dimension_numbers = #tpu.dot_dimension_numbers<[1], [0], [0], [1], [0, 0, 1, 1], [], []>} : vector<16x32xbf16>, vector<32x64xbf16>, vector<16x64xf32> -> vector<16x64xf32>
    %5 = vector.broadcast %3 : vector<1x64xf32> to vector<16x64xf32>
    %6 = arith.addf %4, %5 : vector<16x64xf32>
    %cst_5 = arith.constant 0.000000e+00 : f32
    %7 = vector.broadcast %cst_5 : f32 to vector<16x64xf32>
    %8 = arith.maximumf %6, %7 : vector<16x64xf32>
    %9 = arith.truncf %8 : vector<16x64xf32> to vector<16x64xbf16>
    %c0_6 = arith.constant 0 : index
    %c0_7 = arith.constant 0 : index
    %10 = vector.load %arg4[%c0_6, %c0_7] : memref<64x16xbf16, #tpu.memory_space<vmem>>, vector<64x16xbf16>
    %c0_8 = arith.constant 0 : index
    %c0_9 = arith.constant 0 : index
    %11 = vector.load %arg5[%c0_8, %c0_9] : memref<1x16xf32, #tpu.memory_space<vmem>>, vector<1x16xf32>
    %cst_10 = arith.constant dense<0.000000e+00> : vector<16x16xf32>
    %12 = tpu.matmul %9, %10, %cst_10 {dimension_numbers = #tpu.dot_dimension_numbers<[1], [0], [0], [1], [0, 0, 1, 1], [], []>} : vector<16x64xbf16>, vector<64x16xbf16>, vector<16x16xf32> -> vector<16x16xf32>
    %13 = vector.broadcast %11 : vector<1x16xf32> to vector<16x16xf32>
    %14 = arith.addf %12, %13 : vector<16x16xf32>
    %c0_11 = arith.constant 0 : index
    %c0_12 = arith.constant 0 : index
    %15 = vector.load %arg6[%c0_11, %c0_12] : memref<16x16xf32, #tpu.memory_space<vmem>>, vector<16x16xf32>
    tpu.vector_store %arg6[%c0_11, %c0_12], %14 {strides = array<i32>} : memref<16x16xf32, #tpu.memory_space<vmem>>, vector<16x16xf32>,
    return
  }
  func.func @transform_0(%arg0: i32) -> (i32, i32) {
    %c0_i32 = arith.constant 0 : i32
    %c0_i32_0 = arith.constant 0 : i32
    return %arg0, %c0_i32 : i32, i32
  }
  func.func @transform_1(%arg0: i32) -> (i32, i32) {
    %c0_i32 = arith.constant 0 : i32
    %c0_i32_0 = arith.constant 0 : i32
    %c0_i32_1 = arith.constant 0 : i32
    return %c0_i32, %c0_i32_0 : i32, i32
  }
  func.func @transform_2(%arg0: i32) -> (i32, i32) {
    %c0_i32 = arith.constant 0 : i32
    %c0_i32_0 = arith.constant 0 : i32
    %c0_i32_1 = arith.constant 0 : i32
    return %c0_i32, %c0_i32_0 : i32, i32
  }
  func.func @transform_3(%arg0: i32) -> (i32, i32) {
    %c0_i32 = arith.constant 0 : i32
    %c0_i32_0 = arith.constant 0 : i32
    %c0_i32_1 = arith.constant 0 : i32
    return %c0_i32, %c0_i32_0 : i32, i32
  }
  func.func @transform_4(%arg0: i32) -> (i32, i32) {
    %c0_i32 = arith.constant 0 : i32
    %c0_i32_0 = arith.constant 0 : i32
    %c0_i32_1 = arith.constant 0 : i32
    return %c0_i32, %c0_i32_0 : i32, i32
  }
  func.func @transform_5(%arg0: i32) -> (i32, i32) {
    %c0_i32 = arith.constant 0 : i32
    %c0_i32_0 = arith.constant 0 : i32
    return %arg0, %c0_i32 : i32, i32
  }
}

</mosaic_0001>

<llo_original>
// kernel: tpu_custom_call.1
$region0: #{tpu_custom_call.1}
  #allocation0 [shape = 'u32[]', space=smem, size = 0x4, offset = 0x4, fixed_abs, tag = 'smem constant byte address 0x4 - core index']
  #allocation1 [shape = 'u32[144,128]{1,0:T(1,128)}', space=vmem, size = 0x12000, scoped, tag = 'internal scratch']
  %s0 = inlined_call_operand.vmem [shape: f32[8,32], index: 0, kind: input, shape index: {}]
  %s1 = inlined_call_operand.vmem [shape: bf16[32,64], index: 1, kind: input, shape index: {}]
  %s2 = inlined_call_operand.vmem [shape: f32[1,64], index: 2, kind: input, shape index: {}]
  %s3 = inlined_call_operand.vmem [shape: bf16[64,16], index: 3, kind: input, shape index: {}]
  %s4 = inlined_call_operand.vmem [shape: f32[1,16], index: 4, kind: input, shape index: {}]
  %s5 = inlined_call_operand.hbm [shape: f32[8,16], index: 5, kind: output, shape index: {}]
  %s6 = sld [smem:[#allocation0]]
  $region30: #{tpu_custom_call.1} parent=0
    _
  %s8 = ssub.s32 1, %s6
  %s9 = scalar_select 0, %s8, %s6
  $region1: #{tpu_custom_call.1} parent=0
    #allocation2 [shape = 'u8[8192]{0}', space=vmem, size = 0x2000, scoped, tag = 'output window, operand 0, single buffered']
    #allocation3 [shape = 's32[1]{0}', space=sflag, size = 0x4, scoped, tag = 'scoped memory for tpu_custom_call.1']
    %10 = vsyncpa [#allocation3], 0
    // Predicated region
    $region2: #{tpu_custom_call.1} parent=1 // pred_check
      _
    $region3: #{tpu_custom_call.1} parent=1 // pred_check_branch
      %12 = sbr.rel (0) target = $region5
    $region4: #{tpu_custom_call.1} parent=1 // pred_region
      _
    $region5: #{tpu_custom_call.1} parent=1 // pred_fallthru
      _
    // Predicated region
    $region6: #{tpu_custom_call.1} parent=1 // pred_check
      _
    $region7: #{tpu_custom_call.1} parent=1 // pred_check_branch
      %14 = sbr.rel (0) target = $region9
    $region8: #{tpu_custom_call.1} parent=1 // pred_region
      _
    $region9: #{tpu_custom_call.1} parent=1 // pred_fallthru
      _
    // Predicated region
    $region10: #{tpu_custom_call.1} parent=1 // pred_check
      _
    $region11: #{tpu_custom_call.1} parent=1 // pred_check_branch
      %16 = sbr.rel (0) target = $region13
    $region12: #{tpu_custom_call.1} parent=1 // pred_region
      _
    $region13: #{tpu_custom_call.1} parent=1 // pred_fallthru
      _
    // Predicated region
    $region14: #{tpu_custom_call.1} parent=1 // pred_check
      _
    $region15: #{tpu_custom_call.1} parent=1 // pred_check_branch
      %18 = sbr.rel (0) target = $region17
    $region16: #{tpu_custom_call.1} parent=1 // pred_region
      _
    $region17: #{tpu_custom_call.1} parent=1 // pred_fallthru
      _
    // Predicated region
    $region18: #{tpu_custom_call.1} parent=1 // pred_check
      _
    $region19: #{tpu_custom_call.1} parent=1 // pred_check_branch
      %20 = sbr.rel (0) target = $region21
    $region20: #{tpu_custom_call.1} parent=1 // pred_region
      _
    $region21: #{tpu_custom_call.1} parent=1 // pred_fallthru
      _
    %v22 = vld [vmem:[%s0] sm:$0xff]
    %v23 = vld [vmem:[%s0 + $0x8] sm:$0xff]
    %v24 = vpack.c.bf16 %v23, %v22
    %v25 = vld [vmem:[%s1] sm:$0xf]
    %v26 = vld [vmem:[%s1 + $0x4] sm:$0xf]
    %v27 = vld [vmem:[%s1 + $0x8] sm:$0xf]
    %v28 = vld [vmem:[%s1 + $0xc] sm:$0xf]
    %v29 = vld [vmem:[%s2] sm:$0x1]
    %v31 = vlaneseq
    %v32 = vshrl.u32 %v31, 7
    %v33 = vsub.s32 0, %v32
    %v34 = vrot.slane %v29, %v33
    %v40 = vunpack.c.l.b16 %v25
    %v41 = vunpack.c.l.b16 %v26
    %v42 = vunpack.c.l.b16 %v27
    %v43 = vunpack.c.l.b16 %v28
    %v44 = vpack.c.b16 %v41, %v40
    %v45 = vpack.c.b16 %v43, %v42
    %vm48 = vcmask 261120
    %v50 = vsel %vm48, %v24, 0
    %52 = vmatprep.subr.bf16.mxu0 0
    %53 = vmatpush1.bf16.msra.mxu0 0
    %54 = vmatprep.subr.bf16.mxu0 0
    %55 = vmatpush1.bf16.msra.mxu0 0
    %56 = vmatprep.subr.bf16.mxu0 0
    %57 = vmatpush1.bf16.msra.mxu0 0
    %58 = vmatprep.subr.bf16.mxu0 0
    %59 = vmatpush1.bf16.msra.mxu0 0
    %60 = vmatprep.subr.bf16.mxu0 0
    %61 = vmatpush1.bf16.msra.mxu0 0
    %62 = vmatprep.subr.bf16.mxu0 0
    %63 = vmatpush1.bf16.msra.mxu0 0
    %64 = vmatprep.subr.bf16.mxu0 0
    %65 = vmatpush1.bf16.msra.mxu0 %v45
    %66 = vmatprep.subr.bf16.mxu0 0
    %67 = vmatpush1.bf16.msra.mxu0 %v44
    %68 = vmatprep.subr.bf16.mxu0 0
    %69 = vmatpush2.bf16.msra.mxu0 0
    %70 = vmatprep.subr.bf16.mxu0 0
    %71 = vmatpush2.bf16.msra.mxu0 0
    %72 = vmatprep.subr.bf16.mxu0 0
    %73 = vmatpush2.bf16.msra.mxu0 0
    %74 = vmatprep.subr.bf16.mxu0 0
    %75 = vmatpush2.bf16.msra.mxu0 0
    %76 = vmatprep.subr.bf16.mxu0 0
    %77 = vmatpush2.bf16.msra.mxu0 0
    %78 = vmatprep.subr.bf16.mxu0 0
    %79 = vmatpush2.bf16.msra.mxu0 0
    %80 = vmatprep.subr.bf16.mxu0 0
    %81 = vmatpush2.bf16.msra.mxu0 0
    %82 = vmatprep.subr.bf16.mxu0 0
    %83 = vmatpush2.bf16.msra.mxu0 0
    %84 = vmatprep.mubr.bf16.mxu0 0
    %85 = vmatmul.mubr.bf16.gmra.mxu0 %v50
    %v86 = vpop.f32.mrf.mxu0
    %v87 = vadd.f32 %v34, %v86
    %v88 = vpop.f32.mrf.mxu0
    %v89 = vpop.f32.mrf.mxu0
    %v90 = vadd.f32 %v34, %v89
    %v91 = vpop.f32.mrf.mxu0
    %92 = vdwg.mxu0
    %v93 = vmax.f32 %v87, 0.0
    %v94 = vmax.f32 %v90, 0.0
    %v95 = vpack.c.bf16 %v94, %v93
    %v96 = vld [vmem:[%s3] sm:$0xf]
    %v97 = vld [vmem:[%s3 + $0x4] sm:$0xf]
    %v98 = vld [vmem:[%s3 + $0x8] sm:$0xf]
    %v99 = vld [vmem:[%s3 + $0xc] sm:$0xf]
    %v100 = vld [vmem:[%s3 + $0x10] sm:$0xf]
    %v101 = vld [vmem:[%s3 + $0x14] sm:$0xf]
    %v102 = vld [vmem:[%s3 + $0x18] sm:$0xf]
    %v103 = vld [vmem:[%s3 + $0x1c] sm:$0xf]
    %v104 = vld [vmem:[%s4] sm:$0x1]
    %v106 = vlaneseq
    %v107 = vshrl.u32 %v106, 7
    %v108 = vsub.s32 0, %v107
    %v109 = vrot.slane %v104, %v108
    %v119 = vunpack.c.l.b16 %v96
    %v120 = vunpack.c.l.b16 %v97
    %v121 = vunpack.c.l.b16 %v98
    %v122 = vunpack.c.l.b16 %v99
    %v123 = vunpack.c.l.b16 %v100
    %v124 = vunpack.c.l.b16 %v101
    %v125 = vunpack.c.l.b16 %v102
    %v126 = vunpack.c.l.b16 %v103
    %v127 = vpack.c.b16 %v120, %v119
    %v128 = vpack.c.b16 %v122, %v121
    %v129 = vpack.c.b16 %v124, %v123
    %v130 = vpack.c.b16 %v126, %v125
    %vm135 = vcmask 523264
    %v137 = vsel %vm135, %v95, 0
    %139 = vmatprep.subr.bf16.mxu0 0
    %140 = vmatpush1.bf16.msra.mxu0 0
    %141 = vmatprep.subr.bf16.mxu0 0
    %142 = vmatpush1.bf16.msra.mxu0 0
    %143 = vmatprep.subr.bf16.mxu0 0
    %144 = vmatpush1.bf16.msra.mxu0 0
    %145 = vmatprep.subr.bf16.mxu0 0
    %146 = vmatpush1.bf16.msra.mxu0 0
    %147 = vmatprep.subr.bf16.mxu0 0
    %148 = vmatpush1.bf16.msra.mxu0 %v130
    %149 = vmatprep.subr.bf16.mxu0 0
    %150 = vmatpush1.bf16.msra.mxu0 %v129
    %151 = vmatprep.subr.bf16.mxu0 0
    %152 = vmatpush1.bf16.msra.mxu0 %v128
    %153 = vmatprep.subr.bf16.mxu0 0
    %154 = vmatpush1.bf16.msra.mxu0 %v127
    %155 = vmatprep.subr.bf16.mxu0 0
    %156 = vmatpush2.bf16.msra.mxu0 0
    %157 = vmatprep.subr.bf16.mxu0 0
    %158 = vmatpush2.bf16.msra.mxu0 0
    %159 = vmatprep.subr.bf16.mxu0 0
    %160 = vmatpush2.bf16.msra.mxu0 0
    %161 = vmatprep.subr.bf16.mxu0 0
    %162 = vmatpush2.bf16.msra.mxu0 0
    %163 = vmatprep.subr.bf16.mxu0 0
    %164 = vmatpush2.bf16.msra.mxu0 0
    %165 = vmatprep.subr.bf16.mxu0 0
    %166 = vmatpush2.bf16.msra.mxu0 0
    %167 = vmatprep.subr.bf16.mxu0 0
    %168 = vmatpush2.bf16.msra.mxu0 0
    %169 = vmatprep.subr.bf16.mxu0 0
    %170 = vmatpush2.bf16.msra.mxu0 0
    %171 = vmatprep.mubr.bf16.mxu0 0
    %172 = vmatmul.mubr.bf16.gmra.mxu0 %v137
    %v173 = vpop.f32.mrf.mxu0
    %v174 = vadd.f32 %v109, %v173
    %v175 = vpop.f32.mrf.mxu0
    %v176 = vpop.f32.mrf.mxu0
    %v177 = vadd.f32 %v109, %v176
    %v178 = vpop.f32.mrf.mxu0
    %179 = vdwg.mxu0
    %vm180 = vcmask 130048
    %181 = vst.msk [vmem:[#allocation2] sm:$0xff] %vm180, %v174
    %182 = vst.msk [vmem:[#allocation2 + $0x8] sm:$0xff] %vm180, %v177
    // Predicated region
    $region22: #{tpu_custom_call.1} parent=1 // pred_check
      _
    $region23: #{tpu_custom_call.1} parent=1 // pred_check_branch
      %184 = sbr.rel (0) target = $region25
    $region24: #{tpu_custom_call.1} parent=1 // pred_region
      %s186 = ssub.s32 256, 128
      %187 = vsyncadd [#allocation3], %s186
      %s188 = sshll.u32 [#allocation2], 4
      %s189 = int_to_ptr.vmem [resolvable:$true] %s188
      %194 = dma.vmem_to_hbm [thread:$0]  %s189, 128, %s5, [#allocation3], 128, 128, 8
    $region25: #{tpu_custom_call.1} parent=1 // pred_fallthru
      _
    // Predicated region
    $region26: #{tpu_custom_call.1} parent=1 // pred_check
      _
    $region27: #{tpu_custom_call.1} parent=1 // pred_check_branch
      %196 = sbr.rel (0) target = $region29
    $region28: #{tpu_custom_call.1} parent=1 // pred_region
      %197 = dma.done [#allocation3], 256
    $region29: #{tpu_custom_call.1} parent=1 // pred_fallthru
      _
    %198 = vsyncpa [#allocation3], 1

// kernel: tpu_custom_call.1
$region0: #{tpu_custom_call.1}
  #allocation0 [shape = 'u32[]', space=smem, size = 0x4, offset = 0x4, fixed_abs, tag = 'smem constant byte address 0x4 - core index']
  #allocation1 [shape = 'u32[144,128]{1,0:T(1,128)}', space=vmem, size = 0x12000, scoped, tag = 'internal scratch']
  %s0 = inlined_call_operand.vmem [shape: f32[8,32], index: 0, kind: input, shape index: {}]
  %s1 = inlined_call_operand.vmem [shape: bf16[32,64], index: 1, kind: input, shape index: {}]
  %s2 = inlined_call_operand.vmem [shape: f32[1,64], index: 2, kind: input, shape index: {}]
  %s3 = inlined_call_operand.vmem [shape: bf16[64,16], index: 3, kind: input, shape index: {}]
  %s4 = inlined_call_operand.vmem [shape: f32[1,16], index: 4, kind: input, shape index: {}]
  %s5 = inlined_call_operand.hbm [shape: f32[8,16], index: 5, kind: output, shape index: {}]
  %s6 = sld [smem:[#allocation0]]
  $region30: #{tpu_custom_call.1} parent=0
    _
  %s8 = ssub.s32 1, %s6
  %s9 = scalar_select 0, %s8, %s6
  $region1: #{tpu_custom_call.1} parent=0
    #allocation2 [shape = 'u8[8192]{0}', space=vmem, size = 0x2000, scoped, tag = 'output window, operand 0, single buffered']
    #allocation3 [shape = 's32[1]{0}', space=sflag, size = 0x4, scoped, tag = 'scoped memory for tpu_custom_call.1']
    %10 = vsyncpa [#allocation3], 0
    // Predicated region
    $region2: #{tpu_custom_call.1} parent=1 // pred_check
      _
    $region3: #{tpu_custom_call.1} parent=1 // pred_check_branch
      %12 = sbr.rel (0) target = $region5
    $region4: #{tpu_custom_call.1} parent=1 // pred_region
      _
    $region5: #{tpu_custom_call.1} parent=1 // pred_fallthru
      _
    // Predicated region
    $region6: #{tpu_custom_call.1} parent=1 // pred_check
      _
    $region7: #{tpu_custom_call.1} parent=1 // pred_check_branch
      %14 = sbr.rel (0) target = $region9
    $region8: #{tpu_custom_call.1} parent=1 // pred_region
      _
    $region9: #{tpu_custom_call.1} parent=1 // pred_fallthru
      _
    // Predicated region
    $region10: #{tpu_custom_call.1} parent=1 // pred_check
      _
    $region11: #{tpu_custom_call.1} parent=1 // pred_check_branch
      %16 = sbr.rel (0) target = $region13
    $region12: #{tpu_custom_call.1} parent=1 // pred_region
      _
    $region13: #{tpu_custom_call.1} parent=1 // pred_fallthru
      _
    // Predicated region
    $region14: #{tpu_custom_call.1} parent=1 // pred_check
      _
    $region15: #{tpu_custom_call.1} parent=1 // pred_check_branch
      %18 = sbr.rel (0) target = $region17
    $region16: #{tpu_custom_call.1} parent=1 // pred_region
      _
    $region17: #{tpu_custom_call.1} parent=1 // pred_fallthru
      _
    // Predicated region
    $region18: #{tpu_custom_call.1} parent=1 // pred_check
      _
    $region19: #{tpu_custom_call.1} parent=1 // pred_check_branch
      %20 = sbr.rel (0) target = $region21
    $region20: #{tpu_custom_call.1} parent=1 // pred_region
      _
    $region21: #{tpu_custom_call.1} parent=1 // pred_fallthru
      _
    %v22 = vld [vmem:[%s0] sm:$0xff]
    %v23 = vld [vmem:[%s0 + $0x8] sm:$0xff]
    %v24 = vpack.c.bf16 %v23, %v22
    %v25 = vld [vmem:[%s1] sm:$0xf]
    %v26 = vld [vmem:[%s1 + $0x4] sm:$0xf]
    %v27 = vld [vmem:[%s1 + $0x8] sm:$0xf]
    %v28 = vld [vmem:[%s1 + $0xc] sm:$0xf]
    %v29 = vld [vmem:[%s2] sm:$0x1]
    %v31 = vlaneseq
    %v32 = vshrl.u32 %v31, 7
    %v33 = vsub.s32 0, %v32
    %v34 = vrot.slane %v29, %v33
    %v40 = vunpack.c.l.b16 %v25
    %v41 = vunpack.c.l.b16 %v26
    %v42 = vunpack.c.l.b16 %v27
    %v43 = vunpack.c.l.b16 %v28
    %v44 = vpack.c.b16 %v41, %v40
    %v45 = vpack.c.b16 %v43, %v42
    %vm48 = vcmask 261120
    %v50 = vsel %vm48, %v24, 0
    %52 = vmatprep.subr.bf16.mxu0 0
    %53 = vmatpush1.bf16.msra.mxu0 0
    %54 = vmatprep.subr.bf16.mxu0 0
    %55 = vmatpush1.bf16.msra.mxu0 0
    %56 = vmatprep.subr.bf16.mxu0 0
    %57 = vmatpush1.bf16.msra.mxu0 0
    %58 = vmatprep.subr.bf16.mxu0 0
    %59 = vmatpush1.bf16.msra.mxu0 0
    %60 = vmatprep.subr.bf16.mxu0 0
    %61 = vmatpush1.bf16.msra.mxu0 0
    %62 = vmatprep.subr.bf16.mxu0 0
    %63 = vmatpush1.bf16.msra.mxu0 0
    %64 = vmatprep.subr.bf16.mxu0 0
    %65 = vmatpush1.bf16.msra.mxu0 %v45
    %66 = vmatprep.subr.bf16.mxu0 0
    %67 = vmatpush1.bf16.msra.mxu0 %v44
    %68 = vmatprep.subr.bf16.mxu0 0
    %69 = vmatpush2.bf16.msra.mxu0 0
    %70 = vmatprep.subr.bf16.mxu0 0
    %71 = vmatpush2.bf16.msra.mxu0 0
    %72 = vmatprep.subr.bf16.mxu0 0
    %73 = vmatpush2.bf16.msra.mxu0 0
    %74 = vmatprep.subr.bf16.mxu0 0
    %75 = vmatpush2.bf16.msra.mxu0 0
    %76 = vmatprep.subr.bf16.mxu0 0
    %77 = vmatpush2.bf16.msra.mxu0 0
    %78 = vmatprep.subr.bf16.mxu0 0
    %79 = vmatpush2.bf16.msra.mxu0 0
    %80 = vmatprep.subr.bf16.mxu0 0
    %81 = vmatpush2.bf16.msra.mxu0 0
    %82 = vmatprep.subr.bf16.mxu0 0
    %83 = vmatpush2.bf16.msra.mxu0 0
    %84 = vmatprep.mubr.bf16.mxu0 0
    %85 = vmatmul.mubr.bf16.gmra.mxu0 %v50
    %v86 = vpop.f32.mrf.mxu0
    %v87 = vadd.f32 %v34, %v86
    %v88 = vpop.f32.mrf.mxu0
    %v89 = vpop.f32.mrf.mxu0
    %v90 = vadd.f32 %v34, %v89
    %v91 = vpop.f32.mrf.mxu0
    %92 = vdwg.mxu0
    %v93 = vmax.f32 %v87, 0.0
    %v94 = vmax.f32 %v90, 0.0
    %v95 = vpack.c.bf16 %v94, %v93
    %v96 = vld [vmem:[%s3] sm:$0xf]
    %v97 = vld [vmem:[%s3 + $0x4] sm:$0xf]
    %v98 = vld [vmem:[%s3 + $0x8] sm:$0xf]
    %v99 = vld [vmem:[%s3 + $0xc] sm:$0xf]
    %v100 = vld [vmem:[%s3 + $0x10] sm:$0xf]
    %v101 = vld [vmem:[%s3 + $0x14] sm:$0xf]
    %v102 = vld [vmem:[%s3 + $0x18] sm:$0xf]
    %v103 = vld [vmem:[%s3 + $0x1c] sm:$0xf]
    %v104 = vld [vmem:[%s4] sm:$0x1]
    %v106 = vlaneseq
    %v107 = vshrl.u32 %v106, 7
    %v108 = vsub.s32 0, %v107
    %v109 = vrot.slane %v104, %v108
    %v119 = vunpack.c.l.b16 %v96
    %v120 = vunpack.c.l.b16 %v97
    %v121 = vunpack.c.l.b16 %v98
    %v122 = vunpack.c.l.b16 %v99
    %v123 = vunpack.c.l.b16 %v100
    %v124 = vunpack.c.l.b16 %v101
    %v125 = vunpack.c.l.b16 %v102
    %v126 = vunpack.c.l.b16 %v103
    %v127 = vpack.c.b16 %v120, %v119
    %v128 = vpack.c.b16 %v122, %v121
    %v129 = vpack.c.b16 %v124, %v123
    %v130 = vpack.c.b16 %v126, %v125
    %vm135 = vcmask 523264
    %v137 = vsel %vm135, %v95, 0
    %139 = vmatprep.subr.bf16.mxu0 0
    %140 = vmatpush1.bf16.msra.mxu0 0
    %141 = vmatprep.subr.bf16.mxu0 0
    %142 = vmatpush1.bf16.msra.mxu0 0
    %143 = vmatprep.subr.bf16.mxu0 0
    %144 = vmatpush1.bf16.msra.mxu0 0
    %145 = vmatprep.subr.bf16.mxu0 0
    %146 = vmatpush1.bf16.msra.mxu0 0
    %147 = vmatprep.subr.bf16.mxu0 0
    %148 = vmatpush1.bf16.msra.mxu0 %v130
    %149 = vmatprep.subr.bf16.mxu0 0
    %150 = vmatpush1.bf16.msra.mxu0 %v129
    %151 = vmatprep.subr.bf16.mxu0 0
    %152 = vmatpush1.bf16.msra.mxu0 %v128
    %153 = vmatprep.subr.bf16.mxu0 0
    %154 = vmatpush1.bf16.msra.mxu0 %v127
    %155 = vmatprep.subr.bf16.mxu0 0
    %156 = vmatpush2.bf16.msra.mxu0 0
    %157 = vmatprep.subr.bf16.mxu0 0
    %158 = vmatpush2.bf16.msra.mxu0 0
    %159 = vmatprep.subr.bf16.mxu0 0
    %160 = vmatpush2.bf16.msra.mxu0 0
    %161 = vmatprep.subr.bf16.mxu0 0
    %162 = vmatpush2.bf16.msra.mxu0 0
    %163 = vmatprep.subr.bf16.mxu0 0
    %164 = vmatpush2.bf16.msra.mxu0 0
    %165 = vmatprep.subr.bf16.mxu0 0
    %166 = vmatpush2.bf16.msra.mxu0 0
    %167 = vmatprep.subr.bf16.mxu0 0
    %168 = vmatpush2.bf16.msra.mxu0 0
    %169 = vmatprep.subr.bf16.mxu0 0
    %170 = vmatpush2.bf16.msra.mxu0 0
    %171 = vmatprep.mubr.bf16.mxu0 0
    %172 = vmatmul.mubr.bf16.gmra.mxu0 %v137
    %v173 = vpop.f32.mrf.mxu0
    %v174 = vadd.f32 %v109, %v173
    %v175 = vpop.f32.mrf.mxu0
    %v176 = vpop.f32.mrf.mxu0
    %v177 = vadd.f32 %v109, %v176
    %v178 = vpop.f32.mrf.mxu0
    %179 = vdwg.mxu0
    %vm180 = vcmask 130048
    %181 = vst.msk [vmem:[#allocation2] sm:$0xff] %vm180, %v174
    %182 = vst.msk [vmem:[#allocation2 + $0x8] sm:$0xff] %vm180, %v177
    // Predicated region
    $region22: #{tpu_custom_call.1} parent=1 // pred_check
      _
    $region23: #{tpu_custom_call.1} parent=1 // pred_check_branch
      %184 = sbr.rel (0) target = $region25
    $region24: #{tpu_custom_call.1} parent=1 // pred_region
      %s186 = ssub.s32 256, 128
      %187 = vsyncadd [#allocation3], %s186
      %s188 = sshll.u32 [#allocation2], 4
      %s189 = int_to_ptr.vmem [resolvable:$true] %s188
      %194 = dma.vmem_to_hbm [thread:$0]  %s189, 128, %s5, [#allocation3], 128, 128, 8
    $region25: #{tpu_custom_call.1} parent=1 // pred_fallthru
      _
    // Predicated region
    $region26: #{tpu_custom_call.1} parent=1 // pred_check
      _
    $region27: #{tpu_custom_call.1} parent=1 // pred_check_branch
      %196 = sbr.rel (0) target = $region29
    $region28: #{tpu_custom_call.1} parent=1 // pred_region
      %197 = dma.done [#allocation3], 256
    $region29: #{tpu_custom_call.1} parent=1 // pred_fallthru
      _
    %198 = vsyncpa [#allocation3], 1

</llo_original>
